<compile_context>
chip_gen: v5e
topology: v5e:2x2
jax: 0.10.0
libtpu: 0.0.40
codegen_flags: <defaults>
</compile_context>

<pallas_src>
import functools
import math

import jax
import jax.numpy as jnp
from jax.experimental import pallas as pl
from jax.experimental.pallas import tpu as pltpu


# ----------------------------- fused Pallas kernel -----------------------------

def _cell_embeddings_kernel(ids_ref, word_ref, *rest, seq_tile, add_pos, eps):
    """Per (batch b, seq-tile si) block: gather word rows + positional add + LayerNorm.

    ids:  (B, S) int32 in SMEM (scalar prefetch)
    word: (V, H) f32  VMEM-resident table (constant index_map -> fetched once)
    pos:  (TS, H) f32 combined positional slice for this seq tile   [only if add_pos]
    gamma/beta: (1, H)
    out:  (TS, H) f32 (batch dim squeezed by BlockSpec)
    emb:  (TS, H) f32 VMEM scratch holding the gathered rows
    """
    if add_pos:
        pos_ref, gamma_ref, beta_ref, out_ref, emb_ref = rest
    else:
        gamma_ref, beta_ref, out_ref, emb_ref = rest

    b = pl.program_id(0)
    s0 = pl.program_id(1) * seq_tile

    # ---- gather: one (1, H) row per token, id read as a scalar from SMEM ----
    # Dynamic start only on the sublane (second-minor) dim; lane dim stays full -> lane-dense.
    if seq_tile <= 32:
        # Small tiles (incl. the toy demo): static store offsets, fully unrolled.
        for s in range(seq_tile):
            tok = ids_ref[b, s0 + s]
            emb_ref[pl.ds(s, 1), :] = word_ref[pl.ds(tok, 1), :]
    else:
        def gather_row(s, carry):
            tok = ids_ref[b, s0 + s]
            emb_ref[pl.ds(s, 1), :] = word_ref[pl.ds(tok, 1), :]
            return carry
        jax.lax.fori_loop(0, seq_tile, gather_row, 0)
    # TODO(synk): for vocabularies too large for VMEM, keep word_table in HBM
    # (memory_space=pl.ANY) and replace this loop with a ring of async row DMAs
    # (4-8 in flight) driven by the same SMEM ids.

    emb = emb_ref[...]                                   # (TS, H) f32

    # ---- positional add: BlockSpec already delivered the matching (TS, H) slice ----
    if add_pos:
        emb = emb + pos_ref[...]

    # ---- LayerNorm, single-pass statistics (var = E[x^2] - u^2), rsqrt on the EUP ----
    u = jnp.mean(emb, axis=-1, keepdims=True)
    m2 = jnp.mean(emb * emb, axis=-1, keepdims=True)
    var = m2 - u * u
    xn = (emb - u) * jax.lax.rsqrt(var + eps)
    out_ref[...] = (gamma_ref[...] * xn + beta_ref[...]).astype(out_ref.dtype)
    # dropout: eval mode -> identity
    # TODO(synk): offer a bf16 out_shape to halve HBM writeback if downstream allows it.


# ----------------------------- wrapper -----------------------------

def _pick_seq_tile(seq_len):
    for t in (512, 256, 128, 64, 32, 16, 8):
        if seq_len % t == 0:
            return t
    return seq_len  # fall back to one block covering the full (unaligned) sequence


def cell_embeddings_forward(params, input_ids, *, wo_ppi=False,
                            use_gene_pos_emed=True, eps=1e-12):
    """Equivalent of cell_Embeddings.forward(input_ids) in eval mode."""
    B, S = input_ids.shape
    word_table = params["word_table"]
    V, H = word_table.shape
    ids = input_ids.astype(jnp.int32)                    # (B, S) -> SMEM via scalar prefetch

    # Both positional lookups use position_ids == arange(S); combine the enabled tables
    # ONCE in the wrapper so the kernel does a single add and carries one input stream.
    add_pos = (not wo_ppi) or use_gene_pos_emed
    pos_combined = None
    if add_pos:
        pos_combined = jnp.zeros((S, H), jnp.float32)
        if not wo_ppi:
            pos_combined = pos_combined + params["pretrained_table"][:S]
        if use_gene_pos_emed:
            pos_combined = pos_combined + params["pos_table"][:S]

    ts = _pick_seq_tile(S)
    n_s = S // ts if S % ts == 0 else 1
    grid = (B, n_s)

    in_specs = [pl.BlockSpec((V, H), lambda b, si, ids_ref: (0, 0))]   # whole table, fetched once
    inputs = [word_table]
    if add_pos:
        in_specs.append(pl.BlockSpec((ts, H), lambda b, si, ids_ref: (si, 0)))
        inputs.append(pos_combined)
    in_specs += [pl.BlockSpec((1, H), lambda b, si, ids_ref: (0, 0)),
                 pl.BlockSpec((1, H), lambda b, si, ids_ref: (0, 0))]
    inputs += [params["gamma"], params["beta"]]

    out_spec = pl.BlockSpec((None, ts, H), lambda b, si, ids_ref: (b, si, 0))

    kern = functools.partial(_cell_embeddings_kernel, seq_tile=ts,
                             add_pos=add_pos, eps=eps)

    # Explicit VMEM budget (v7x physical is only 64 MiB; keep well under ~48 MiB).
    blk_bytes = ts * H * 4
    vmem_need = (int(word_table.nbytes)
                 + (int(pos_combined.nbytes) if add_pos else 0)
                 + 4 * blk_bytes          # double-buffered pos + out blocks
                 + blk_bytes              # gather scratch
                 + (2 << 20))             # headroom
    vmem_limit = int(min(48 << 20, max(vmem_need, 16 << 20)))

    cost = pl.CostEstimate(
        flops=int(B * S * H * 8),                      # add + LN arithmetic
        transcendentals=int(B * S),                    # rsqrt per token
        bytes_accessed=int(2 * B * S * H * 4 + word_table.nbytes + ids.size * 4),
    )

    # TODO(synk): pad H to a multiple of 128 in the real model config for unmasked vst
    # (toy H=32 keeps the last dim == full array, which is still legal).
    out = pl.pallas_call(
        kern,
        out_shape=jax.ShapeDtypeStruct((B, S, H), jnp.float32),
        grid_spec=pltpu.PrefetchScalarGridSpec(
            num_scalar_prefetch=1,
            grid=grid,
            in_specs=in_specs,
            out_specs=out_spec,
            scratch_shapes=[pltpu.VMEM((ts, H), jnp.float32)],
        ),
        compiler_params=pltpu.CompilerParams(
            dimension_semantics=("parallel", "parallel"),
            vmem_limit_bytes=vmem_limit,
        ),
        cost_estimate=cost,
    )(ids, *inputs)
    return out


# ----------------------------- pure-JAX reference -----------------------------

def ref_forward(params, input_ids, *, wo_ppi=False, use_gene_pos_emed=True, eps=1e-12):
    S = input_ids.shape[1]
    emb = params["word_table"][input_ids]                      # (B, S, H)
    if not wo_ppi:
        emb = emb + params["pretrained_table"][:S][None]
    if use_gene_pos_emed:
        emb = emb + params["pos_table"][:S][None]
    u = emb.mean(-1, keepdims=True)
    var = ((emb - u) ** 2).mean(-1, keepdims=True)
    xn = (emb - u) / jnp.sqrt(var + eps)
    return params["gamma"][0] * xn + params["beta"][0]


# ----------------------------- parameter init -----------------------------

def init_params(key, vocab_size, hidden, max_position, pretrained_dim):
    k_w, k_pre, k_lw, k_lb, k_pos = jax.random.split(key, 5)
    # nn.Embedding default init: N(0, 1)
    word_table = jax.random.normal(k_w, (vocab_size, hidden), jnp.float32)
    pre_raw = jax.random.normal(k_pre, (max_position, pretrained_dim), jnp.float32)
    if pretrained_dim != hidden:
        # __init__-time nn.Linear projection of the pretrained table (one-time, not forward)
        bound = 1.0 / math.sqrt(pretrained_dim)
        w_lin = jax.random.uniform(k_lw, (hidden, pretrained_dim), jnp.float32, -bound, bound)
        b_lin = jax.random.uniform(k_lb, (1, hidden), jnp.float32, -bound, bound)
        pretrained_table = pre_raw @ w_lin.T + b_lin           # (P, H)
    else:
        pretrained_table = pre_raw
    pos_table = jax.random.normal(k_pos, (max_position, hidden), jnp.float32)
    return {
        "word_table": word_table,
        "pretrained_table": pretrained_table,
        "pos_table": pos_table,
        "gamma": jnp.ones((1, hidden), jnp.float32),   # LayerNorm init: ones / zeros
        "beta": jnp.zeros((1, hidden), jnp.float32),
    }


# ----------------------------- main -----------------------------

if __name__ == "__main__":
    B, S = 2, 8
    vocab_size, hidden, max_position, pretrained_dim = 128, 32, 16, 16

    key = jax.random.PRNGKey(0)
    k_ids, k_params = jax.random.split(key)
    input_ids = jax.random.randint(k_ids, (B, S), 0, vocab_size, dtype=jnp.int32)
    params = init_params(k_params, vocab_size, hidden, max_position, pretrained_dim)

    # default path: wo_ppi=False (add pretrained/PPI embed), use_gene_pos_emed=True
    out = cell_embeddings_forward(params, input_ids)
    jax.block_until_ready(out)
    ref = ref_forward(params, input_ids)
    assert out.shape == (B, S, hidden)
    assert jnp.allclose(out, ref, atol=1e-4, rtol=1e-4), "embeddings mismatch (full path)"

    # also exercise the args.wo_ppi=True / no gene-position static branch (no positional input)
    out2 = cell_embeddings_forward(params, input_ids, wo_ppi=True, use_gene_pos_emed=False)
    jax.block_until_ready(out2)
    ref2 = ref_forward(params, input_ids, wo_ppi=True, use_gene_pos_emed=False)
    assert jnp.allclose(out2, ref2, atol=1e-4, rtol=1e-4), "embeddings mismatch (wo_ppi)"

    print("KERNEL_OK")
</pallas_src>

<mosaic_0001>
module attributes {stable_mosaic.version = 11 : i64} {
  func.func @_cell_embeddings_kernel(%arg0: i32, %arg1: i32, %arg2: memref<2x8xi32, #tpu.memory_space<smem>>, %arg3: memref<128x32xf32, #tpu.memory_space<vmem>>, %arg4: memref<8x32xf32, #tpu.memory_space<vmem>>, %arg5: memref<1x32xf32, #tpu.memory_space<vmem>>, %arg6: memref<1x32xf32, #tpu.memory_space<vmem>>, %arg7: memref<1x8x32xf32, #tpu.memory_space<vmem>>, %arg8: memref<8x32xf32, #tpu.memory_space<vmem>>) attributes {dimension_semantics = [#tpu.dimension_semantics<parallel>, #tpu.dimension_semantics<parallel>], iteration_bounds = array<i64: 2, 1>, scalar_prefetch = 1 : i64, scratch_operands = 1 : i64, tpu.core_type = #tpu.core_type<tc>, window_params = [{pipeline_mode = #tpu.pipeline_mode<synchronous>, transform_indices = @transform_0, window_bounds = array<i64: 128, 32>}, {transform_indices = @transform_1, window_bounds = array<i64: 8, 32>}, {pipeline_mode = #tpu.pipeline_mode<synchronous>, transform_indices = @transform_2, window_bounds = array<i64: 1, 32>}, {pipeline_mode = #tpu.pipeline_mode<synchronous>, transform_indices = @transform_3, window_bounds = array<i64: 1, 32>}, {transform_indices = @transform_4, window_bounds = array<i64: 1, 8, 32>}]} {
    %c8_i32 = arith.constant 8 : i32
    %0 = arith.muli %arg1, %c8_i32 : i32
    %c0_i32 = arith.constant 0 : i32
    %1 = arith.addi %0, %c0_i32 : i32
    %2 = arith.index_cast %arg0 : i32 to index
    %3 = arith.index_cast %1 : i32 to index
    %4 = memref.load %arg2[%2, %3] : memref<2x8xi32, #tpu.memory_space<smem>>
    %5 = arith.index_cast %4 : i32 to index
    %c0 = arith.constant 0 : index
    %6 = vector.load %arg3[%5, %c0] : memref<128x32xf32, #tpu.memory_space<vmem>>, vector<1x32xf32>
    %c0_0 = arith.constant 0 : index
    %c0_1 = arith.constant 0 : index
    %7 = vector.load %arg8[%c0_0, %c0_1] : memref<8x32xf32, #tpu.memory_space<vmem>>, vector<1x32xf32>
    tpu.vector_store %arg8[%c0_0, %c0_1], %6 {strides = array<i32>} : memref<8x32xf32, #tpu.memory_space<vmem>>, vector<1x32xf32>,
    %c1_i32 = arith.constant 1 : i32
    %8 = arith.addi %0, %c1_i32 : i32
    %9 = arith.index_cast %arg0 : i32 to index
    %10 = arith.index_cast %8 : i32 to index
    %11 = memref.load %arg2[%9, %10] : memref<2x8xi32, #tpu.memory_space<smem>>
    %12 = arith.index_cast %11 : i32 to index
    %c0_2 = arith.constant 0 : index
    %13 = vector.load %arg3[%12, %c0_2] : memref<128x32xf32, #tpu.memory_space<vmem>>, vector<1x32xf32>
    %c1 = arith.constant 1 : index
    %c0_3 = arith.constant 0 : index
    %14 = vector.load %arg8[%c1, %c0_3] : memref<8x32xf32, #tpu.memory_space<vmem>>, vector<1x32xf32>
    tpu.vector_store %arg8[%c1, %c0_3], %13 {strides = array<i32>} : memref<8x32xf32, #tpu.memory_space<vmem>>, vector<1x32xf32>,
    %c2_i32 = arith.constant 2 : i32
    %15 = arith.addi %0, %c2_i32 : i32
    %16 = arith.index_cast %arg0 : i32 to index
    %17 = arith.index_cast %15 : i32 to index
    %18 = memref.load %arg2[%16, %17] : memref<2x8xi32, #tpu.memory_space<smem>>
    %19 = arith.index_cast %18 : i32 to index
    %c0_4 = arith.constant 0 : index
    %20 = vector.load %arg3[%19, %c0_4] : memref<128x32xf32, #tpu.memory_space<vmem>>, vector<1x32xf32>
    %c2 = arith.constant 2 : index
    %c0_5 = arith.constant 0 : index
    %21 = vector.load %arg8[%c2, %c0_5] : memref<8x32xf32, #tpu.memory_space<vmem>>, vector<1x32xf32>
    tpu.vector_store %arg8[%c2, %c0_5], %20 {strides = array<i32>} : memref<8x32xf32, #tpu.memory_space<vmem>>, vector<1x32xf32>,
    %c3_i32 = arith.constant 3 : i32
    %22 = arith.addi %0, %c3_i32 : i32
    %23 = arith.index_cast %arg0 : i32 to index
    %24 = arith.index_cast %22 : i32 to index
    %25 = memref.load %arg2[%23, %24] : memref<2x8xi32, #tpu.memory_space<smem>>
    %26 = arith.index_cast %25 : i32 to index
    %c0_6 = arith.constant 0 : index
    %27 = vector.load %arg3[%26, %c0_6] : memref<128x32xf32, #tpu.memory_space<vmem>>, vector<1x32xf32>
    %c3 = arith.constant 3 : index
    %c0_7 = arith.constant 0 : index
    %28 = vector.load %arg8[%c3, %c0_7] : memref<8x32xf32, #tpu.memory_space<vmem>>, vector<1x32xf32>
    tpu.vector_store %arg8[%c3, %c0_7], %27 {strides = array<i32>} : memref<8x32xf32, #tpu.memory_space<vmem>>, vector<1x32xf32>,
    %c4_i32 = arith.constant 4 : i32
    %29 = arith.addi %0, %c4_i32 : i32
    %30 = arith.index_cast %arg0 : i32 to index
    %31 = arith.index_cast %29 : i32 to index
    %32 = memref.load %arg2[%30, %31] : memref<2x8xi32, #tpu.memory_space<smem>>
    %33 = arith.index_cast %32 : i32 to index
    %c0_8 = arith.constant 0 : index
    %34 = vector.load %arg3[%33, %c0_8] : memref<128x32xf32, #tpu.memory_space<vmem>>, vector<1x32xf32>
    %c4 = arith.constant 4 : index
    %c0_9 = arith.constant 0 : index
    %35 = vector.load %arg8[%c4, %c0_9] : memref<8x32xf32, #tpu.memory_space<vmem>>, vector<1x32xf32>
    tpu.vector_store %arg8[%c4, %c0_9], %34 {strides = array<i32>} : memref<8x32xf32, #tpu.memory_space<vmem>>, vector<1x32xf32>,
    %c5_i32 = arith.constant 5 : i32
    %36 = arith.addi %0, %c5_i32 : i32
    %37 = arith.index_cast %arg0 : i32 to index
    %38 = arith.index_cast %36 : i32 to index
    %39 = memref.load %arg2[%37, %38] : memref<2x8xi32, #tpu.memory_space<smem>>
    %40 = arith.index_cast %39 : i32 to index
    %c0_10 = arith.constant 0 : index
    %41 = vector.load %arg3[%40, %c0_10] : memref<128x32xf32, #tpu.memory_space<vmem>>, vector<1x32xf32>
    %c5 = arith.constant 5 : index
    %c0_11 = arith.constant 0 : index
    %42 = vector.load %arg8[%c5, %c0_11] : memref<8x32xf32, #tpu.memory_space<vmem>>, vector<1x32xf32>
    tpu.vector_store %arg8[%c5, %c0_11], %41 {strides = array<i32>} : memref<8x32xf32, #tpu.memory_space<vmem>>, vector<1x32xf32>,
    %c6_i32 = arith.constant 6 : i32
    %43 = arith.addi %0, %c6_i32 : i32
    %44 = arith.index_cast %arg0 : i32 to index
    %45 = arith.index_cast %43 : i32 to index
    %46 = memref.load %arg2[%44, %45] : memref<2x8xi32, #tpu.memory_space<smem>>
    %47 = arith.index_cast %46 : i32 to index
    %c0_12 = arith.constant 0 : index
    %48 = vector.load %arg3[%47, %c0_12] : memref<128x32xf32, #tpu.memory_space<vmem>>, vector<1x32xf32>
    %c6 = arith.constant 6 : index
    %c0_13 = arith.constant 0 : index
    %49 = vector.load %arg8[%c6, %c0_13] : memref<8x32xf32, #tpu.memory_space<vmem>>, vector<1x32xf32>
    tpu.vector_store %arg8[%c6, %c0_13], %48 {strides = array<i32>} : memref<8x32xf32, #tpu.memory_space<vmem>>, vector<1x32xf32>,
    %c7_i32 = arith.constant 7 : i32
    %50 = arith.addi %0, %c7_i32 : i32
    %51 = arith.index_cast %arg0 : i32 to index
    %52 = arith.index_cast %50 : i32 to index
    %53 = memref.load %arg2[%51, %52] : memref<2x8xi32, #tpu.memory_space<smem>>
    %54 = arith.index_cast %53 : i32 to index
    %c0_14 = arith.constant 0 : index
    %55 = vector.load %arg3[%54, %c0_14] : memref<128x32xf32, #tpu.memory_space<vmem>>, vector<1x32xf32>
    %c7 = arith.constant 7 : index
    %c0_15 = arith.constant 0 : index
    %56 = vector.load %arg8[%c7, %c0_15] : memref<8x32xf32, #tpu.memory_space<vmem>>, vector<1x32xf32>
    tpu.vector_store %arg8[%c7, %c0_15], %55 {strides = array<i32>} : memref<8x32xf32, #tpu.memory_space<vmem>>, vector<1x32xf32>,
    %c0_16 = arith.constant 0 : index
    %c0_17 = arith.constant 0 : index
    %57 = vector.load %arg8[%c0_16, %c0_17] : memref<8x32xf32, #tpu.memory_space<vmem>>, vector<8x32xf32>
    %c0_18 = arith.constant 0 : index
    %c0_19 = arith.constant 0 : index
    %58 = vector.load %arg4[%c0_18, %c0_19] : memref<8x32xf32, #tpu.memory_space<vmem>>, vector<8x32xf32>
    %59 = arith.addf %57, %58 : vector<8x32xf32>
    %cst = arith.constant dense<0.000000e+00> : vector<8xf32>
    %60 = vector.multi_reduction <add>, %59, %cst [1] : vector<8x32xf32> to vector<8xf32>
    %61 = vector.shape_cast %60 : vector<8xf32> to vector<8x1xf32>
    %cst_20 = arith.constant 3.200000e+01 : f32
    %62 = vector.broadcast %cst_20 : f32 to vector<8x1xf32>
    %63 = arith.divf %61, %62 : vector<8x1xf32>
    %64 = arith.mulf %59, %59 : vector<8x32xf32>
    %cst_21 = arith.constant dense<0.000000e+00> : vector<8xf32>
    %65 = vector.multi_reduction <add>, %64, %cst_21 [1] : vector<8x32xf32> to vector<8xf32>
    %66 = vector.shape_cast %65 : vector<8xf32> to vector<8x1xf32>
    %cst_22 = arith.constant 3.200000e+01 : f32
    %67 = vector.broadcast %cst_22 : f32 to vector<8x1xf32>
    %68 = arith.divf %66, %67 : vector<8x1xf32>
    %69 = arith.mulf %63, %63 : vector<8x1xf32>
    %70 = arith.subf %68, %69 : vector<8x1xf32>
    %71 = vector.broadcast %63 : vector<8x1xf32> to vector<8x32xf32>
    %72 = arith.subf %59, %71 : vector<8x32xf32>
    %cst_23 = arith.constant 9.99999996E-13 : f32
    %73 = vector.broadcast %cst_23 : f32 to vector<8x1xf32>
    %74 = arith.addf %70, %73 : vector<8x1xf32>
    %75 = math.rsqrt %74 : vector<8x1xf32>
    %76 = vector.broadcast %75 : vector<8x1xf32> to vector<8x32xf32>
    %77 = arith.mulf %72, %76 : vector<8x32xf32>
    %c0_24 = arith.constant 0 : index
    %c0_25 = arith.constant 0 : index
    %78 = vector.load %arg5[%c0_24, %c0_25] : memref<1x32xf32, #tpu.memory_space<vmem>>, vector<1x32xf32>
    %79 = vector.broadcast %78 : vector<1x32xf32> to vector<8x32xf32>
    %80 = arith.mulf %79, %77 : vector<8x32xf32>
    %c0_26 = arith.constant 0 : index
    %c0_27 = arith.constant 0 : index
    %81 = vector.load %arg6[%c0_26, %c0_27] : memref<1x32xf32, #tpu.memory_space<vmem>>, vector<1x32xf32>
    %82 = vector.broadcast %81 : vector<1x32xf32> to vector<8x32xf32>
    %83 = arith.addf %80, %82 : vector<8x32xf32>
    %c0_28 = arith.constant 0 : index
    %c0_29 = arith.constant 0 : index
    %c0_30 = arith.constant 0 : index
    %84 = vector.load %arg7[%c0_28, %c0_29, %c0_30] : memref<1x8x32xf32, #tpu.memory_space<vmem>>, vector<1x8x32xf32>
    %85 = vector.shape_cast %84 : vector<1x8x32xf32> to vector<8x32xf32>
    %86 = vector.shape_cast %83 : vector<8x32xf32> to vector<1x8x32xf32>
    tpu.vector_store %arg7[%c0_28, %c0_29, %c0_30], %86 {strides = array<i32>} : memref<1x8x32xf32, #tpu.memory_space<vmem>>, vector<1x8x32xf32>,
    return
  }
  func.func @transform_0(%arg0: i32, %arg1: i32, %arg2: memref<2x8xi32, #tpu.memory_space<smem>>) -> (i32, i32) {
    %c0_i32 = arith.constant 0 : i32
    %c0_i32_0 = arith.constant 0 : i32
    %c0_i32_1 = arith.constant 0 : i32
    return %c0_i32, %c0_i32_0 : i32, i32
  }
  func.func @transform_1(%arg0: i32, %arg1: i32, %arg2: memref<2x8xi32, #tpu.memory_space<smem>>) -> (i32, i32) {
    %c0_i32 = arith.constant 0 : i32
    %c0_i32_0 = arith.constant 0 : i32
    return %arg1, %c0_i32 : i32, i32
  }
  func.func @transform_2(%arg0: i32, %arg1: i32, %arg2: memref<2x8xi32, #tpu.memory_space<smem>>) -> (i32, i32) {
    %c0_i32 = arith.constant 0 : i32
    %c0_i32_0 = arith.constant 0 : i32
    %c0_i32_1 = arith.constant 0 : i32
    return %c0_i32, %c0_i32_0 : i32, i32
  }
  func.func @transform_3(%arg0: i32, %arg1: i32, %arg2: memref<2x8xi32, #tpu.memory_space<smem>>) -> (i32, i32) {
    %c0_i32 = arith.constant 0 : i32
    %c0_i32_0 = arith.constant 0 : i32
    %c0_i32_1 = arith.constant 0 : i32
    return %c0_i32, %c0_i32_0 : i32, i32
  }
  func.func @transform_4(%arg0: i32, %arg1: i32, %arg2: memref<2x8xi32, #tpu.memory_space<smem>>) -> (i32, i32, i32) {
    %c0_i32 = arith.constant 0 : i32
    %c0_i32_0 = arith.constant 0 : i32
    return %arg0, %arg1, %c0_i32 : i32, i32, i32
  }
}

</mosaic_0001>

<llo_original>
// kernel: tpu_custom_call.1
$region0: #{tpu_custom_call.1}
  #allocation0 [shape = 'u32[]', space=smem, size = 0x4, offset = 0x4, fixed_abs, tag = 'smem constant byte address 0x4 - core index']
  #allocation1 [shape = 'u32[72,128]{1,0:T(1,128)}', space=vmem, size = 0x9000, scoped, tag = 'internal scratch']
  #allocation2 [shape = 'f32[8,32]{1,0:T(8,128)}', space=vmem, size = 0x1000, scoped, tag = 'scratch operand']
  #allocation3 [shape = 's32[1]{0}', space=sflag, size = 0x4, scoped, tag = 'scoped memory for tpu_custom_call.1']
  #allocation4 [shape = 'u8[1024]{0}', space=smem, size = 0x400, scoped, tag = 'prefetched SMEM operand 0']
  %s0 = inlined_call_operand.vmem [shape: s32[2,8], index: 0, kind: input, shape index: {}]
  %s1 = inlined_call_operand.vmem [shape: f32[128,32], index: 1, kind: input, shape index: {}]
  %s2 = inlined_call_operand.vmem [shape: f32[8,32], index: 2, kind: input, shape index: {}]
  %s3 = inlined_call_operand.vmem [shape: f32[1,32], index: 3, kind: input, shape index: {}]
  %s4 = inlined_call_operand.vmem [shape: f32[1,32], index: 4, kind: input, shape index: {}]
  %s5 = inlined_call_operand.hbm [shape: f32[2,8,32], index: 5, kind: output, shape index: {}]
  %s6 = sld [smem:[#allocation0]]
  $region49: #{tpu_custom_call.1} parent=0
    _
  %s8 = ssub.s32 1, %s6
  %s9 = scalar_select 0, %s8, %s6
  %s11 = sshll.u32 %s0, 4
  %s12 = int_to_ptr.vmem [resolvable:$true] %s11
  %14 = dma.vmem_to_smem %s12, 32, [#allocation4], [#allocation3]
  %16 = dma.done [#allocation3], 32
  %17 = sfence
  $region1: #{tpu_custom_call.1} parent=0
    #allocation5 [shape = 'u8[8192]{0}', space=vmem, size = 0x2000, scoped, tag = 'output window, operand 0']
    #allocation6 [shape = 's32[2]{0}', space=sflag, size = 0x8, scoped, tag = 'scoped memory for tpu_custom_call.1']
    %18 = vsyncpa [#allocation6], 0
    %s19 = scalar_lea.sflag [#allocation6], 1
    %20 = vsyncpa %s19, 0
    loop: start=0, step=1, limit=4
    $region2: #{tpu_custom_call.1} parent=1 // loop_pre_header
      _
    $region3: #{tpu_custom_call.1} parent=1 // loop_header
      %s22 = sphi 0, %s26
      %p23 = scmp.ge.s32.totalorder %s22, 4
      %s29 = sphi 0, %s41
      %s30 = sphi 0, %s37
      %s31 = sphi 0, %s29
      %s32 = sphi 0, %s30
      %s33 = sphi 0, %s31
      %s34 = sphi 0, %s32
      %s42 = sphi 0, %s42
      %s44 = sphi 0, %s42
      %s45 = sphi 0, %s44
      %s59 = sphi 0, %s45
      %s65 = sphi 0, %s67
      %s68 = sphi 0, %s65
      %s69 = sphi 0, %s68
      %s85 = sphi 0, %s69
      %s89 = sphi 0, %s89
      %s91 = sphi 0, %s89
      %s92 = sphi 0, %s91
      %s106 = sphi 0, %s92
      %s110 = sphi 0, %s110
      %s112 = sphi 0, %s110
      %s113 = sphi 0, %s112
      %s127 = sphi 0, %s113
      %s135 = sphi 0, %s137
      %s138 = sphi 0, %s135
      %s139 = sphi 0, %s138
      %s155 = sphi 0, %s139
    $region4: #{tpu_custom_call.1} parent=1 // loop_header_branch
      %25 = sbr.rel (%p23) target = $region8
    $region5: #{tpu_custom_call.1} parent=1 // loop_body
      %s27 = ssub.s32 %s22, 1
      %s28 = ssub.s32 %s22, 2
      %s35 = sadd.s32 1, %s30
      %p36 = scmp.ge.s32.totalorder %s35, 1
      %s37 = scalar_select %p36, 0, %s35
      %s38 = sadd.s32 1, %s29
      %s39 = scalar_select %p36, %s38, %s29
      %p40 = scmp.ge.s32.totalorder %s39, 2
      %s41 = scalar_select %p40, 0, %s39
      %s43 = sadd.s32 %s42, 1
      %p46 = scmp.eq.s32.totalorder %s22, 1
      %p47 = scmp.ne.s32.totalorder %s42, %s44
      %p48 = scmp.eq.s32.totalorder %s22, 0
      %p49 = por %p47, %p48
      %p50 = scmp.ne.s32.totalorder %s42, %s44
      %p51 = scmp.eq.s32.totalorder %s27, 1
      %p52 = por %p50, %p51
      %p53 = scmp.ne.s32.totalorder %s44, %s45
      %p54 = scmp.eq.s32.totalorder %s27, 0
      %p55 = por %p53, %p54
      %p56 = scmp.ne.s32.totalorder %s44, %s45
      %p57 = scmp.eq.s32.totalorder %s28, 1
      %p58 = por %p56, %p57
      %p60 = scmp.ne.s32.totalorder %s45, %s59
      %p61 = scmp.eq.s32.totalorder %s28, 0
      %p62 = por %p60, %p61
      %s63 = ssub.s32 %s30, %s37
      %p64 = scmp.eq.s32.totalorder %s63, 0
      %s66 = sadd.s32 %s65, 1
      %s67 = scalar_select %p64, %s65, %s66
      %p70 = pneg %p64
      %p71 = scmp.eq.s32.totalorder %s22, 1
      %p72 = por %p70, %p71
      %p73 = scmp.ne.s32.totalorder %s65, %s68
      %p74 = scmp.eq.s32.totalorder %s22, 0
      %p75 = por %p73, %p74
      %p76 = scmp.ne.s32.totalorder %s65, %s68
      %p77 = scmp.eq.s32.totalorder %s27, 1
      %p78 = por %p76, %p77
      %p79 = scmp.ne.s32.totalorder %s68, %s69
      %p80 = scmp.eq.s32.totalorder %s27, 0
      %p81 = por %p79, %p80
      %p82 = scmp.ne.s32.totalorder %s68, %s69
      %p83 = scmp.eq.s32.totalorder %s28, 1
      %p84 = por %p82, %p83
      %p86 = scmp.ne.s32.totalorder %s69, %s85
      %p87 = scmp.eq.s32.totalorder %s28, 0
      %p88 = por %p86, %p87
      %s90 = sadd.s32 %s89, 1
      %p93 = scmp.eq.s32.totalorder %s22, 1
      %p94 = scmp.ne.s32.totalorder %s89, %s91
      %p95 = scmp.eq.s32.totalorder %s22, 0
      %p96 = por %p94, %p95
      %p97 = scmp.ne.s32.totalorder %s89, %s91
      %p98 = scmp.eq.s32.totalorder %s27, 1
      %p99 = por %p97, %p98
      %p100 = scmp.ne.s32.totalorder %s91, %s92
      %p101 = scmp.eq.s32.totalorder %s27, 0
      %p102 = por %p100, %p101
      %p103 = scmp.ne.s32.totalorder %s91, %s92
      %p104 = scmp.eq.s32.totalorder %s28, 1
      %p105 = por %p103, %p104
      %p107 = scmp.ne.s32.totalorder %s92, %s106
      %p108 = scmp.eq.s32.totalorder %s28, 0
      %p109 = por %p107, %p108
      %s111 = sadd.s32 %s110, 1
      %p114 = scmp.eq.s32.totalorder %s22, 1
      %p115 = scmp.ne.s32.totalorder %s110, %s112
      %p116 = scmp.eq.s32.totalorder %s22, 0
      %p117 = por %p115, %p116
      %p118 = scmp.ne.s32.totalorder %s110, %s112
      %p119 = scmp.eq.s32.totalorder %s27, 1
      %p120 = por %p118, %p119
      %p121 = scmp.ne.s32.totalorder %s112, %s113
      %p122 = scmp.eq.s32.totalorder %s27, 0
      %p123 = por %p121, %p122
      %p124 = scmp.ne.s32.totalorder %s112, %s113
      %p125 = scmp.eq.s32.totalorder %s28, 1
      %p126 = por %p124, %p125
      %p128 = scmp.ne.s32.totalorder %s113, %s127
      %p129 = scmp.eq.s32.totalorder %s28, 0
      %p130 = por %p128, %p129
      %s131 = ssub.s32 %s29, %s41
      %s132 = ssub.s32 %s30, %s37
      %s133 = sor.u32 %s131, %s132
      %p134 = scmp.eq.s32.totalorder %s133, 0
      %s136 = sadd.s32 %s135, 1
      %s137 = scalar_select %p134, %s135, %s136
      %p140 = pneg %p134
      %p141 = scmp.eq.s32.totalorder %s22, 1
      %p142 = por %p140, %p141
      %p143 = scmp.ne.s32.totalorder %s135, %s138
      %p144 = scmp.eq.s32.totalorder %s22, 0
      %p145 = por %p143, %p144
      %p146 = scmp.ne.s32.totalorder %s135, %s138
      %p147 = scmp.eq.s32.totalorder %s27, 1
      %p148 = por %p146, %p147
      %p149 = scmp.ne.s32.totalorder %s138, %s139
      %p150 = scmp.eq.s32.totalorder %s27, 0
      %p151 = por %p149, %p150
      %p152 = scmp.ne.s32.totalorder %s138, %s139
      %p153 = scmp.eq.s32.totalorder %s28, 1
      %p154 = por %p152, %p153
      %p156 = scmp.ne.s32.totalorder %s139, %s155
      %p157 = scmp.eq.s32.totalorder %s28, 0
      %p158 = por %p156, %p157
      %p159 = scmp.le.s32.totalorder 1, %s22
      %p160 = scmp.lt.s32.totalorder %s22, 3
      %p161 = pnand %p159, %p160
      %p162 = pneg %p161
      // Predicated region
      $region9: #{tpu_custom_call.1} parent=5 // pred_check
        _
      $region10: #{tpu_custom_call.1} parent=5 // pred_check_branch
        %164 = sbr.rel (%p161) target = $region12
      $region11: #{tpu_custom_call.1} parent=5 // pred_region
        %s165 = ssub.s32 %s22, 1
        // Predicated region
        $region13: #{tpu_custom_call.1} parent=11 // pred_check
          %p166 = pneg %p55
        $region14: #{tpu_custom_call.1} parent=11 // pred_check_branch
          %168 = sbr.rel (%p166) target = $region16
        $region15: #{tpu_custom_call.1} parent=11 // pred_region
          _
        $region16: #{tpu_custom_call.1} parent=11 // pred_fallthru
          _
        // Predicated region
        $region17: #{tpu_custom_call.1} parent=11 // pred_check
          %p169 = pneg %p81
        $region18: #{tpu_custom_call.1} parent=11 // pred_check_branch
          %171 = sbr.rel (%p169) target = $region20
        $region19: #{tpu_custom_call.1} parent=11 // pred_region
          %p172 = scmp.lt.s32.totalorder %s32, 0
          %s173 = scalar_select %p172, %s32, 0
          %s174 = smul.addr %s173, 8
          %s175 = scalar_lea.vmem %s2, %s174
        $region20: #{tpu_custom_call.1} parent=11 // pred_fallthru
          _
        // Predicated region
        $region21: #{tpu_custom_call.1} parent=11 // pred_check
          %p176 = pneg %p102
        $region22: #{tpu_custom_call.1} parent=11 // pred_check_branch
          %178 = sbr.rel (%p176) target = $region24
        $region23: #{tpu_custom_call.1} parent=11 // pred_region
          _
        $region24: #{tpu_custom_call.1} parent=11 // pred_fallthru
          _
        // Predicated region
        $region25: #{tpu_custom_call.1} parent=11 // pred_check
          %p179 = pneg %p123
        $region26: #{tpu_custom_call.1} parent=11 // pred_check_branch
          %181 = sbr.rel (%p179) target = $region28
        $region27: #{tpu_custom_call.1} parent=11 // pred_region
          _
        $region28: #{tpu_custom_call.1} parent=11 // pred_fallthru
          _
      $region12: #{tpu_custom_call.1} parent=5 // pred_fallthru
        _
      %p182 = scmp.lt.s32.totalorder %s22, 2
      // Predicated region
      $region29: #{tpu_custom_call.1} parent=5 // pred_check
        %p183 = pneg %p182
      $region30: #{tpu_custom_call.1} parent=5 // pred_check_branch
        %185 = sbr.rel (%p183) target = $region32
      $region31: #{tpu_custom_call.1} parent=5 // pred_region
        _
      $region32: #{tpu_custom_call.1} parent=5 // pred_fallthru
        _
      %p186 = scmp.le.s32.totalorder 1, %s22
      %p187 = scmp.lt.s32.totalorder %s22, 3
      %p188 = pnand %p186, %p187
      %p189 = pneg %p188
      // Predicated region
      $region33: #{tpu_custom_call.1} parent=5 // pred_check
        _
      $region34: #{tpu_custom_call.1} parent=5 // pred_check_branch
        %191 = sbr.rel (%p188) target = $region36
      $region35: #{tpu_custom_call.1} parent=5 // pred_region
        %s192 = ssub.s32 %s22, 1
        %p193 = pneg %p55
        %p194 = pneg %p52
        %p195 = scmp.lt.s32.totalorder %s32, 0
        %s196 = scalar_select %p195, %s32, 0
        %s197 = smul.addr %s196, 8
        %s198 = scalar_lea.vmem %s2, %s197
        %p199 = pneg %p81
        %p200 = pneg %p78
        %p201 = pneg %p102
        %p202 = pneg %p99
        %p203 = pneg %p123
        %p204 = pneg %p120
        %p205 = pneg %p151
        %p206 = pneg %p148
        %s207 = sand.u32 %s138, 1
        %s208 = scalar_lea.sflag [#allocation6], %s207
        %s209 = sand.u32 %s138, 1
        %s210 = smul.addr %s209, 8
        %s211 = scalar_lea.vmem [#allocation5], %s210
        %p212 = scmp.lt.s32.totalorder %s32, 0
        %s213 = scalar_select %p212, %s32, 0
        %s214 = smul.addr %s213, 8
        %s215 = scalar_lea.vmem %s2, %s214
        %s216 = smul.u32 %s32, 8
        %s217 = sshra.s32 %s216, 7
        %s218 = sand.u32 %s216, 127
        %s219 = sadd.s32 %s217, %s31
        %s220 = smul.u32 %s219, 128
        %s221 = sshra.s32 %s216, 7
        %s222 = sand.u32 %s216, 127
        %s223 = sadd.s32 %s220, %s222
        %s224 = sld [smem:[#allocation4 + %s223]]
        %s225 = scalar_lea.vmem %s1, %s224
        %v226 = vld [vmem:[%s225] sm:$0x1]
        %vm227 = vcmask 253952
        %228 = vst.msk [vmem:[#allocation2] sm:$0x1] %vm227, %v226
        %s229 = sadd.s32 %s216, 1
        %s230 = sshra.s32 %s229, 7
        %s231 = sand.u32 %s229, 127
        %s232 = sadd.s32 %s230, %s31
        %s233 = smul.u32 %s232, 128
        %s234 = sshra.s32 %s229, 7
        %s235 = sand.u32 %s229, 127
        %s236 = sadd.s32 %s233, %s235
        %s237 = sld [smem:[#allocation4 + %s236]]
        %s238 = scalar_lea.vmem %s1, %s237
        %v239 = vld [vmem:[%s238] sm:$0x1]
        %240 = vst.msk [vmem:[#allocation2 + $0x1] sm:$0x1] %vm227, %v239
        %s241 = sadd.s32 %s216, 2
        %s242 = sshra.s32 %s241, 7
        %s243 = sand.u32 %s241, 127
        %s244 = sadd.s32 %s242, %s31
        %s245 = smul.u32 %s244, 128
        %s246 = sshra.s32 %s241, 7
        %s247 = sand.u32 %s241, 127
        %s248 = sadd.s32 %s245, %s247
        %s249 = sld [smem:[#allocation4 + %s248]]
        %s250 = scalar_lea.vmem %s1, %s249
        %v251 = vld [vmem:[%s250] sm:$0x1]
        %252 = vst.msk [vmem:[#allocation2 + $0x2] sm:$0x1] %vm227, %v251
        %s253 = sadd.s32 %s216, 3
        %s254 = sshra.s32 %s253, 7
        %s255 = sand.u32 %s253, 127
        %s256 = sadd.s32 %s254, %s31
        %s257 = smul.u32 %s256, 128
        %s258 = sshra.s32 %s253, 7
        %s259 = sand.u32 %s253, 127
        %s260 = sadd.s32 %s257, %s259
        %s261 = sld [smem:[#allocation4 + %s260]]
        %s262 = scalar_lea.vmem %s1, %s261
        %v263 = vld [vmem:[%s262] sm:$0x1]
        %264 = vst.msk [vmem:[#allocation2 + $0x3] sm:$0x1] %vm227, %v263
        %s265 = sadd.s32 %s216, 4
        %s266 = sshra.s32 %s265, 7
        %s267 = sand.u32 %s265, 127
        %s268 = sadd.s32 %s266, %s31
        %s269 = smul.u32 %s268, 128
        %s270 = sshra.s32 %s265, 7
        %s271 = sand.u32 %s265, 127
        %s272 = sadd.s32 %s269, %s271
        %s273 = sld [smem:[#allocation4 + %s272]]
        %s274 = scalar_lea.vmem %s1, %s273
        %v275 = vld [vmem:[%s274] sm:$0x1]
        %276 = vst.msk [vmem:[#allocation2 + $0x4] sm:$0x1] %vm227, %v275
        %s277 = sadd.s32 %s216, 5
        %s278 = sshra.s32 %s277, 7
        %s279 = sand.u32 %s277, 127
        %s280 = sadd.s32 %s278, %s31
        %s281 = smul.u32 %s280, 128
        %s282 = sshra.s32 %s277, 7
        %s283 = sand.u32 %s277, 127
        %s284 = sadd.s32 %s281, %s283
        %s285 = sld [smem:[#allocation4 + %s284]]
        %s286 = scalar_lea.vmem %s1, %s285
        %v287 = vld [vmem:[%s286] sm:$0x1]
        %288 = vst.msk [vmem:[#allocation2 + $0x5] sm:$0x1] %vm227, %v287
        %s289 = sadd.s32 %s216, 6
        %s290 = sshra.s32 %s289, 7
        %s291 = sand.u32 %s289, 127
        %s292 = sadd.s32 %s290, %s31
        %s293 = smul.u32 %s292, 128
        %s294 = sshra.s32 %s289, 7
        %s295 = sand.u32 %s289, 127
        %s296 = sadd.s32 %s293, %s295
        %s297 = sld [smem:[#allocation4 + %s296]]
        %s298 = scalar_lea.vmem %s1, %s297
        %v299 = vld [vmem:[%s298] sm:$0x1]
        %300 = vst.msk [vmem:[#allocation2 + $0x6] sm:$0x1] %vm227, %v299
        %s301 = sadd.s32 %s216, 7
        %s302 = sshra.s32 %s301, 7
        %s303 = sand.u32 %s301, 127
        %s304 = sadd.s32 %s302, %s31
        %s305 = smul.u32 %s304, 128
        %s306 = sshra.s32 %s301, 7
        %s307 = sand.u32 %s301, 127
        %s308 = sadd.s32 %s305, %s307
        %s309 = sld [smem:[#allocation4 + %s308]]
        %s310 = scalar_lea.vmem %s1, %s309
        %v311 = vld [vmem:[%s310] sm:$0x1]
        %312 = vst.msk [vmem:[#allocation2 + $0x7] sm:$0x1] %vm227, %v311
        %v313 = vld [vmem:[#allocation2] sm:$0xff]
        %v314 = vld [vmem:[%s215] sm:$0xff]
        %v315 = vadd.f32 %v313, %v314
        %vm316 = vcmask 261120
        %v317 = vsel %vm316, %v315, 0.0
        %318 = vadd.xlane.f32.xlu0 %v317
        %v319 = vpop.xlane.xlu0 %318
        %v320 = vrcp.pop 32.0
        %v321 = vmul.f32 32.0, %v320
        %v322 = vsub.f32 1.0, %v321
        %v323 = vmul.f32 %v320, %v322
        %v324 = vadd.f32 %v320, %v323
        %vm325 = vweird.f32 %v320
        %v326 = vsel %vm325, %v320, %v324
        %v327 = vmul.f32 %v319, %v326
        %v328 = vmul.f32 %v315, %v315
        %v329 = vsel %vm316, %v328, 0.0
        %330 = vadd.xlane.f32.xlu0 %v329
        %v331 = vpop.xlane.xlu0 %330
        %v332 = vmul.f32 %v331, %v326
        %v333 = vmul.f32 %v327, %v327
        %v334 = vsub.f32 %v332, %v333
        %v335 = vsub.f32 %v315, %v327
        %v336 = vadd.f32 %v334, 1e-12
        %v337 = vrsqrt.pop %v336
        %v338 = vmul.f32 %v337, %v336
        %v339 = vmul.f32 %v338, %v337
        %v340 = vmul.f32 0.5, %v339
        %v341 = vsub.f32 1.5, %v340
        %v342 = vmul.f32 %v337, %v341
        %vm343 = vweird.f32 %v336
        %vm344 = vweird.f32 %v337
        %vm345 = vmor %vm343, %vm344
        %v346 = vsel %vm345, %v337, %v342
        %v347 = vmul.f32 %v335, %v346
        %v348 = vld [vmem:[%s3] sm:$0x1]
        %v350 = vperm.slane %v348, 0
        %v352 = vmul.f32 %v350, %v347
        %v353 = vld [vmem:[%s4] sm:$0x1]
        %v355 = vperm.slane %v353, 0
        %v357 = vadd.f32 %v352, %v355
        %358 = vst.msk [vmem:[%s211] sm:$0xff] %vm316, %v357
        %s359 = sand.u32 %s138, 1
        %s360 = scalar_lea.sflag [#allocation6], %s359
        %s361 = sand.u32 %s138, 1
        %s362 = smul.addr %s361, 8
        %s363 = scalar_lea.vmem [#allocation5], %s362
        // Predicated region
        $region37: #{tpu_custom_call.1} parent=35 // pred_check
          %p364 = pneg %p148
        $region38: #{tpu_custom_call.1} parent=35 // pred_check_branch
          %366 = sbr.rel (%p364) target = $region40
        $region39: #{tpu_custom_call.1} parent=35 // pred_region
          %368 = vsyncadd %s360, 0
          %s369 = sadd.s32 %s32, %s31
          %s370 = smul.addr %s369, 8
          %s371 = scalar_lea.hbm %s5, %s370
          %s373 = sshll.u32 %s363, 4
          %s374 = int_to_ptr.vmem [resolvable:$true] %s373
          %s375 = sshll.u32 %s371, 4
          %s376 = int_to_ptr.hbm [resolvable:$true] %s375
          %378 = dma.vmem_to_hbm [thread:$0]  %s374, 128, %s376, %s360
        $region40: #{tpu_custom_call.1} parent=35 // pred_fallthru
          _
      $region36: #{tpu_custom_call.1} parent=5 // pred_fallthru
        _
      %p379 = scmp.le.s32.totalorder 2, %s22
      // Predicated region
      $region41: #{tpu_custom_call.1} parent=5 // pred_check
        %p380 = pneg %p379
      $region42: #{tpu_custom_call.1} parent=5 // pred_check_branch
        %382 = sbr.rel (%p380) target = $region44
      $region43: #{tpu_custom_call.1} parent=5 // pred_region
        %s383 = ssub.s32 %s22, 2
        // Predicated region
        $region45: #{tpu_custom_call.1} parent=43 // pred_check
          %p384 = pneg %p154
        $region46: #{tpu_custom_call.1} parent=43 // pred_check_branch
          %386 = sbr.rel (%p384) target = $region48
        $region47: #{tpu_custom_call.1} parent=43 // pred_region
          %s387 = sand.u32 %s139, 1
          %s388 = scalar_lea.sflag [#allocation6], %s387
          %s389 = sand.u32 %s139, 1
          %s390 = smul.addr %s389, 8
          %s391 = scalar_lea.vmem [#allocation5], %s390
          %393 = dma.done %s388, 128
        $region48: #{tpu_custom_call.1} parent=43 // pred_fallthru
          _
      $region44: #{tpu_custom_call.1} parent=5 // pred_fallthru
        _
    $region6: #{tpu_custom_call.1} parent=1 // loop_footer
      %s26 = sadd.s32 1, %s22
    $region7: #{tpu_custom_call.1} parent=1 // loop_footer_branch
      %21 = sbr.rel target = $region3
    $region8: #{tpu_custom_call.1} parent=1 // loop_exit
      _
    %394 = vsyncpa [#allocation6], 1
    %s395 = scalar_lea.sflag [#allocation6], 1
    %396 = vsyncpa %s395, 1

</llo_original>
